<compile_context>
chip_gen: v5e
topology: v5e:2x2
jax: 0.10.0
libtpu: 0.0.40
codegen_flags: <defaults>
</compile_context>

<pallas_src>
import functools
import math

import jax
import jax.numpy as jnp
from jax.experimental import pallas as pl
from jax.experimental.pallas import tpu as pltpu


# ----------------------------------------------------------------------------
# Kernel
# ----------------------------------------------------------------------------

def _complex_addnorm_kernel(xr_ref, xi_ref, yr_ref, yi_ref,
                            grr_ref, gii_ref, gri_ref, br_ref, bi_ref,
                            or_ref, oi_ref, *, eps):
    """Fused ComplexAddNorm for one (rows, H) tile.

    out = ComplexLayerNorm(Y + X); gamma/beta refs are (1, H) and broadcast.
    """
    sr = xr_ref[...] + yr_ref[...]
    si = xi_ref[...] + yi_ref[...]
    h = sr.shape[-1]

    # per-component mean over the (full, un-tiled) feature axis
    mr = jnp.mean(sr, axis=-1, keepdims=True)
    mi = jnp.mean(si, axis=-1, keepdims=True)
    dr = sr - mr
    di = si - mi

    # torch.var is unbiased -> divide by (H - 1)
    inv_hm1 = 1.0 / (h - 1)
    vr = jnp.sum(dr * dr, axis=-1, keepdims=True) * inv_hm1
    vi = jnp.sum(di * di, axis=-1, keepdims=True) * inv_hm1

    # EUP rsqrt + multiply instead of sqrt + two divides on the VALU
    inv = jax.lax.rsqrt(vr + vi + eps)
    nr = dr * inv
    ni = di * inv

    grr = grr_ref[...]
    gii = gii_ref[...]
    gri = gri_ref[...]
    or_ref[...] = nr * grr + ni * gri + br_ref[...]
    oi_ref[...] = nr * gri + ni * gii + bi_ref[...]


# ----------------------------------------------------------------------------
# Wrapper
# ----------------------------------------------------------------------------

def _round_up(n, m):
    return (n + m - 1) // m * m


def complex_addnorm(X, Y, params, *, eps=1e-9, block_rows=512):
    """ComplexAddNorm.forward(X, Y) = ComplexLayerNorm(ComplexDropout(Y) + X).

    X, Y: float32 arrays in torch layout [..., H, 2] (last dim = real/imag).
    Dropout is the eval-mode identity.
    # TODO(synk): training-mode ComplexDropout (F.dropout1d channel mask) not implemented.
    """
    assert X.shape == Y.shape and X.shape[-1] == 2
    h = X.shape[-2]
    lead = X.shape[:-2]
    n = math.prod(lead) if lead else 1

    xr = X[..., 0].reshape(n, h)
    xi = X[..., 1].reshape(n, h)
    yr = Y[..., 0].reshape(n, h)
    yi = Y[..., 1].reshape(n, h)

    # Row tiling: full feature dim per block (required so mean / unbiased var
    # are computed over the whole normalized_shape); pad rows so the grid
    # divides evenly.  Padded rows produce finite garbage and are sliced off.
    rows = min(block_rows, _round_up(n, 8))
    n_pad = _round_up(n, rows)
    if n_pad != n:
        pad = ((0, n_pad - n), (0, 0))
        xr, xi = jnp.pad(xr, pad), jnp.pad(xi, pad)
        yr, yi = jnp.pad(yr, pad), jnp.pad(yi, pad)

    grr = params['gamma_rr'].reshape(1, h).astype(jnp.float32)
    gii = params['gamma_ii'].reshape(1, h).astype(jnp.float32)
    gri = params['gamma_ri'].reshape(1, h).astype(jnp.float32)
    beta = params['beta'].astype(jnp.float32)
    br = beta[:, 0].reshape(1, h)
    bi = beta[:, 1].reshape(1, h)

    row_spec = pl.BlockSpec((rows, h), lambda i: (i, 0))
    par_spec = pl.BlockSpec((1, h), lambda i: (0, 0))

    kern = functools.partial(_complex_addnorm_kernel, eps=eps)
    or_, oi_ = pl.pallas_call(
        kern,
        grid=(n_pad // rows,),
        in_specs=[row_spec] * 4 + [par_spec] * 5,
        out_specs=(row_spec, row_spec),
        out_shape=(jax.ShapeDtypeStruct((n_pad, h), jnp.float32),) * 2,
        compiler_params=pltpu.CompilerParams(
            dimension_semantics=("parallel",),      # v7x: shard rows across 2 TCs
            vmem_limit_bytes=32 * 1024 * 1024),
    )(xr, xi, yr, yi, grr, gii, gri, br, bi)

    or_ = or_[:n].reshape(*lead, h)
    oi_ = oi_[:n].reshape(*lead, h)
    return jnp.stack((or_, oi_), axis=-1)           # back to torch [..., H, 2]


# ----------------------------------------------------------------------------
# Pure-JAX reference (mirrors the PyTorch module semantics exactly)
# ----------------------------------------------------------------------------

def _reference_addnorm(X, Y, params, eps=1e-9):
    s = Y + X
    m = jnp.mean(s, axis=-2, keepdims=True)
    vr = jnp.var(s[..., 0], axis=-1, ddof=1)      # torch.var is unbiased
    vi = jnp.var(s[..., 1], axis=-1, ddof=1)
    div = jnp.sqrt(vr + vi + eps)[..., None, None]
    sn = (s - m) / div
    r, i = sn[..., 0], sn[..., 1]
    out = jnp.stack((r * params['gamma_rr'] + i * params['gamma_ri'],
                     r * params['gamma_ri'] + i * params['gamma_ii']), axis=-1)
    return out + params['beta']


# ----------------------------------------------------------------------------
# Main
# ----------------------------------------------------------------------------

if __name__ == "__main__":
    B, S, H = 2, 8, 32          # normalized_shape = H = 32

    key = jax.random.PRNGKey(0)
    kx, ky, kg1, kg2, kg3, kb = jax.random.split(key, 6)
    X = jax.random.normal(kx, (B, S, H, 2), jnp.float32)
    Y = jax.random.normal(ky, (B, S, H, 2), jnp.float32)

    # module init values, perturbed so the gamma cross-term / beta are exercised
    params = {
        'gamma_rr': jnp.full((H,), 1.0 / math.sqrt(2.0), jnp.float32)
                    + 0.1 * jax.random.normal(kg1, (H,), jnp.float32),
        'gamma_ii': jnp.full((H,), 1.0 / math.sqrt(2.0), jnp.float32)
                    + 0.1 * jax.random.normal(kg2, (H,), jnp.float32),
        'gamma_ri': 0.1 * jax.random.normal(kg3, (H,), jnp.float32),
        'beta': 0.1 * jax.random.normal(kb, (H, 2), jnp.float32),
    }

    out = complex_addnorm(X, Y, params)
    out = jax.block_until_ready(out)

    ref = _reference_addnorm(X, Y, params)
    assert out.shape == (B, S, H, 2)
    assert bool(jnp.all(jnp.isfinite(out)))
    assert bool(jnp.allclose(out, ref, atol=1e-5, rtol=1e-5))
    print("KERNEL_OK")
</pallas_src>

<mosaic_0001>
module attributes {stable_mosaic.version = 11 : i64} {
  func.func @_complex_addnorm_kernel(%arg0: i32, %arg1: memref<16x32xf32, #tpu.memory_space<vmem>>, %arg2: memref<16x32xf32, #tpu.memory_space<vmem>>, %arg3: memref<16x32xf32, #tpu.memory_space<vmem>>, %arg4: memref<16x32xf32, #tpu.memory_space<vmem>>, %arg5: memref<1x32xf32, #tpu.memory_space<vmem>>, %arg6: memref<1x32xf32, #tpu.memory_space<vmem>>, %arg7: memref<1x32xf32, #tpu.memory_space<vmem>>, %arg8: memref<1x32xf32, #tpu.memory_space<vmem>>, %arg9: memref<1x32xf32, #tpu.memory_space<vmem>>, %arg10: memref<16x32xf32, #tpu.memory_space<vmem>>, %arg11: memref<16x32xf32, #tpu.memory_space<vmem>>) attributes {dimension_semantics = [#tpu.dimension_semantics<parallel>], iteration_bounds = array<i64: 1>, scalar_prefetch = 0 : i64, scratch_operands = 0 : i64, tpu.core_type = #tpu.core_type<tc>, window_params = [{transform_indices = @transform_0, window_bounds = array<i64: 16, 32>}, {transform_indices = @transform_1, window_bounds = array<i64: 16, 32>}, {transform_indices = @transform_2, window_bounds = array<i64: 16, 32>}, {transform_indices = @transform_3, window_bounds = array<i64: 16, 32>}, {pipeline_mode = #tpu.pipeline_mode<synchronous>, transform_indices = @transform_4, window_bounds = array<i64: 1, 32>}, {pipeline_mode = #tpu.pipeline_mode<synchronous>, transform_indices = @transform_5, window_bounds = array<i64: 1, 32>}, {pipeline_mode = #tpu.pipeline_mode<synchronous>, transform_indices = @transform_6, window_bounds = array<i64: 1, 32>}, {pipeline_mode = #tpu.pipeline_mode<synchronous>, transform_indices = @transform_7, window_bounds = array<i64: 1, 32>}, {pipeline_mode = #tpu.pipeline_mode<synchronous>, transform_indices = @transform_8, window_bounds = array<i64: 1, 32>}, {transform_indices = @transform_9, window_bounds = array<i64: 16, 32>}, {transform_indices = @transform_10, window_bounds = array<i64: 16, 32>}]} {
    %c0 = arith.constant 0 : index
    %c0_0 = arith.constant 0 : index
    %0 = vector.load %arg1[%c0, %c0_0] : memref<16x32xf32, #tpu.memory_space<vmem>>, vector<16x32xf32>
    %c0_1 = arith.constant 0 : index
    %c0_2 = arith.constant 0 : index
    %1 = vector.load %arg3[%c0_1, %c0_2] : memref<16x32xf32, #tpu.memory_space<vmem>>, vector<16x32xf32>
    %2 = arith.addf %0, %1 : vector<16x32xf32>
    %c0_3 = arith.constant 0 : index
    %c0_4 = arith.constant 0 : index
    %3 = vector.load %arg2[%c0_3, %c0_4] : memref<16x32xf32, #tpu.memory_space<vmem>>, vector<16x32xf32>
    %c0_5 = arith.constant 0 : index
    %c0_6 = arith.constant 0 : index
    %4 = vector.load %arg4[%c0_5, %c0_6] : memref<16x32xf32, #tpu.memory_space<vmem>>, vector<16x32xf32>
    %5 = arith.addf %3, %4 : vector<16x32xf32>
    %cst = arith.constant dense<0.000000e+00> : vector<16xf32>
    %6 = vector.multi_reduction <add>, %2, %cst [1] : vector<16x32xf32> to vector<16xf32>
    %7 = vector.shape_cast %6 : vector<16xf32> to vector<16x1xf32>
    %cst_7 = arith.constant 3.200000e+01 : f32
    %8 = vector.broadcast %cst_7 : f32 to vector<16x1xf32>
    %9 = arith.divf %7, %8 : vector<16x1xf32>
    %cst_8 = arith.constant dense<0.000000e+00> : vector<16xf32>
    %10 = vector.multi_reduction <add>, %5, %cst_8 [1] : vector<16x32xf32> to vector<16xf32>
    %11 = vector.shape_cast %10 : vector<16xf32> to vector<16x1xf32>
    %cst_9 = arith.constant 3.200000e+01 : f32
    %12 = vector.broadcast %cst_9 : f32 to vector<16x1xf32>
    %13 = arith.divf %11, %12 : vector<16x1xf32>
    %14 = vector.broadcast %9 : vector<16x1xf32> to vector<16x32xf32>
    %15 = arith.subf %2, %14 : vector<16x32xf32>
    %16 = vector.broadcast %13 : vector<16x1xf32> to vector<16x32xf32>
    %17 = arith.subf %5, %16 : vector<16x32xf32>
    %18 = arith.mulf %15, %15 : vector<16x32xf32>
    %cst_10 = arith.constant dense<0.000000e+00> : vector<16xf32>
    %19 = vector.multi_reduction <add>, %18, %cst_10 [1] : vector<16x32xf32> to vector<16xf32>
    %20 = vector.shape_cast %19 : vector<16xf32> to vector<16x1xf32>
    %cst_11 = arith.constant 0.0322580636 : f32
    %21 = vector.broadcast %cst_11 : f32 to vector<16x1xf32>
    %22 = arith.mulf %20, %21 : vector<16x1xf32>
    %23 = arith.mulf %17, %17 : vector<16x32xf32>
    %cst_12 = arith.constant dense<0.000000e+00> : vector<16xf32>
    %24 = vector.multi_reduction <add>, %23, %cst_12 [1] : vector<16x32xf32> to vector<16xf32>
    %25 = vector.shape_cast %24 : vector<16xf32> to vector<16x1xf32>
    %cst_13 = arith.constant 0.0322580636 : f32
    %26 = vector.broadcast %cst_13 : f32 to vector<16x1xf32>
    %27 = arith.mulf %25, %26 : vector<16x1xf32>
    %28 = arith.addf %22, %27 : vector<16x1xf32>
    %cst_14 = arith.constant 9.99999971E-10 : f32
    %29 = vector.broadcast %cst_14 : f32 to vector<16x1xf32>
    %30 = arith.addf %28, %29 : vector<16x1xf32>
    %31 = math.rsqrt %30 : vector<16x1xf32>
    %32 = vector.broadcast %31 : vector<16x1xf32> to vector<16x32xf32>
    %33 = arith.mulf %15, %32 : vector<16x32xf32>
    %34 = vector.broadcast %31 : vector<16x1xf32> to vector<16x32xf32>
    %35 = arith.mulf %17, %34 : vector<16x32xf32>
    %c0_15 = arith.constant 0 : index
    %c0_16 = arith.constant 0 : index
    %36 = vector.load %arg5[%c0_15, %c0_16] : memref<1x32xf32, #tpu.memory_space<vmem>>, vector<1x32xf32>
    %c0_17 = arith.constant 0 : index
    %c0_18 = arith.constant 0 : index
    %37 = vector.load %arg6[%c0_17, %c0_18] : memref<1x32xf32, #tpu.memory_space<vmem>>, vector<1x32xf32>
    %c0_19 = arith.constant 0 : index
    %c0_20 = arith.constant 0 : index
    %38 = vector.load %arg7[%c0_19, %c0_20] : memref<1x32xf32, #tpu.memory_space<vmem>>, vector<1x32xf32>
    %39 = vector.broadcast %36 : vector<1x32xf32> to vector<16x32xf32>
    %40 = arith.mulf %33, %39 : vector<16x32xf32>
    %41 = vector.broadcast %38 : vector<1x32xf32> to vector<16x32xf32>
    %42 = arith.mulf %35, %41 : vector<16x32xf32>
    %43 = arith.addf %40, %42 : vector<16x32xf32>
    %c0_21 = arith.constant 0 : index
    %c0_22 = arith.constant 0 : index
    %44 = vector.load %arg8[%c0_21, %c0_22] : memref<1x32xf32, #tpu.memory_space<vmem>>, vector<1x32xf32>
    %45 = vector.broadcast %44 : vector<1x32xf32> to vector<16x32xf32>
    %46 = arith.addf %43, %45 : vector<16x32xf32>
    %c0_23 = arith.constant 0 : index
    %c0_24 = arith.constant 0 : index
    %47 = vector.load %arg10[%c0_23, %c0_24] : memref<16x32xf32, #tpu.memory_space<vmem>>, vector<16x32xf32>
    tpu.vector_store %arg10[%c0_23, %c0_24], %46 {strides = array<i32>} : memref<16x32xf32, #tpu.memory_space<vmem>>, vector<16x32xf32>,
    %48 = vector.broadcast %38 : vector<1x32xf32> to vector<16x32xf32>
    %49 = arith.mulf %33, %48 : vector<16x32xf32>
    %50 = vector.broadcast %37 : vector<1x32xf32> to vector<16x32xf32>
    %51 = arith.mulf %35, %50 : vector<16x32xf32>
    %52 = arith.addf %49, %51 : vector<16x32xf32>
    %c0_25 = arith.constant 0 : index
    %c0_26 = arith.constant 0 : index
    %53 = vector.load %arg9[%c0_25, %c0_26] : memref<1x32xf32, #tpu.memory_space<vmem>>, vector<1x32xf32>
    %54 = vector.broadcast %53 : vector<1x32xf32> to vector<16x32xf32>
    %55 = arith.addf %52, %54 : vector<16x32xf32>
    %c0_27 = arith.constant 0 : index
    %c0_28 = arith.constant 0 : index
    %56 = vector.load %arg11[%c0_27, %c0_28] : memref<16x32xf32, #tpu.memory_space<vmem>>, vector<16x32xf32>
    tpu.vector_store %arg11[%c0_27, %c0_28], %55 {strides = array<i32>} : memref<16x32xf32, #tpu.memory_space<vmem>>, vector<16x32xf32>,
    return
  }
  func.func @transform_0(%arg0: i32) -> (i32, i32) {
    %c0_i32 = arith.constant 0 : i32
    %c0_i32_0 = arith.constant 0 : i32
    return %arg0, %c0_i32 : i32, i32
  }
  func.func @transform_1(%arg0: i32) -> (i32, i32) {
    %c0_i32 = arith.constant 0 : i32
    %c0_i32_0 = arith.constant 0 : i32
    return %arg0, %c0_i32 : i32, i32
  }
  func.func @transform_2(%arg0: i32) -> (i32, i32) {
    %c0_i32 = arith.constant 0 : i32
    %c0_i32_0 = arith.constant 0 : i32
    return %arg0, %c0_i32 : i32, i32
  }
  func.func @transform_3(%arg0: i32) -> (i32, i32) {
    %c0_i32 = arith.constant 0 : i32
    %c0_i32_0 = arith.constant 0 : i32
    return %arg0, %c0_i32 : i32, i32
  }
  func.func @transform_4(%arg0: i32) -> (i32, i32) {
    %c0_i32 = arith.constant 0 : i32
    %c0_i32_0 = arith.constant 0 : i32
    %c0_i32_1 = arith.constant 0 : i32
    return %c0_i32, %c0_i32_0 : i32, i32
  }
  func.func @transform_5(%arg0: i32) -> (i32, i32) {
    %c0_i32 = arith.constant 0 : i32
    %c0_i32_0 = arith.constant 0 : i32
    %c0_i32_1 = arith.constant 0 : i32
    return %c0_i32, %c0_i32_0 : i32, i32
  }
  func.func @transform_6(%arg0: i32) -> (i32, i32) {
    %c0_i32 = arith.constant 0 : i32
    %c0_i32_0 = arith.constant 0 : i32
    %c0_i32_1 = arith.constant 0 : i32
    return %c0_i32, %c0_i32_0 : i32, i32
  }
  func.func @transform_7(%arg0: i32) -> (i32, i32) {
    %c0_i32 = arith.constant 0 : i32
    %c0_i32_0 = arith.constant 0 : i32
    %c0_i32_1 = arith.constant 0 : i32
    return %c0_i32, %c0_i32_0 : i32, i32
  }
  func.func @transform_8(%arg0: i32) -> (i32, i32) {
    %c0_i32 = arith.constant 0 : i32
    %c0_i32_0 = arith.constant 0 : i32
    %c0_i32_1 = arith.constant 0 : i32
    return %c0_i32, %c0_i32_0 : i32, i32
  }
  func.func @transform_9(%arg0: i32) -> (i32, i32) {
    %c0_i32 = arith.constant 0 : i32
    %c0_i32_0 = arith.constant 0 : i32
    return %arg0, %c0_i32 : i32, i32
  }
  func.func @transform_10(%arg0: i32) -> (i32, i32) {
    %c0_i32 = arith.constant 0 : i32
    %c0_i32_0 = arith.constant 0 : i32
    return %arg0, %c0_i32 : i32, i32
  }
}

</mosaic_0001>

<llo_original>
// kernel: tpu_custom_call.1
$region0: #{tpu_custom_call.1}
  #allocation0 [shape = 'u32[]', space=smem, size = 0x4, offset = 0x4, fixed_abs, tag = 'smem constant byte address 0x4 - core index']
  #allocation1 [shape = 'u32[72,128]{1,0:T(1,128)}', space=vmem, size = 0x9000, scoped, tag = 'internal scratch']
  %s0 = inlined_call_operand.hbm [shape: f32[16,32], index: 0, kind: input, shape index: {}]
  %s1 = inlined_call_operand.hbm [shape: f32[16,32], index: 1, kind: input, shape index: {}]
  %s2 = inlined_call_operand.hbm [shape: f32[16,32], index: 2, kind: input, shape index: {}]
  %s3 = inlined_call_operand.hbm [shape: f32[16,32], index: 3, kind: input, shape index: {}]
  %s4 = inlined_call_operand.vmem [shape: f32[1,32], index: 4, kind: input, shape index: {}]
  %s5 = inlined_call_operand.vmem [shape: f32[1,32], index: 5, kind: input, shape index: {}]
  %s6 = inlined_call_operand.vmem [shape: f32[1,32], index: 6, kind: input, shape index: {}]
  %s7 = inlined_call_operand.vmem [shape: f32[1,32], index: 7, kind: input, shape index: {}]
  %s8 = inlined_call_operand.vmem [shape: f32[1,32], index: 8, kind: input, shape index: {}]
  %s9 = inlined_call_operand.hbm [shape: f32[16,32], index: 9, kind: output, shape index: {0}]
  %s10 = inlined_call_operand.hbm [shape: f32[16,32], index: 10, kind: output, shape index: {1}]
  %11 = xla_tuple %s9, %s10
  %s12 = sld [smem:[#allocation0]]
  $region70: #{tpu_custom_call.1} parent=0
    _
  %s14 = ssub.s32 1, %s12
  %s15 = scalar_select 0, %s14, %s12
  $region1: #{tpu_custom_call.1} parent=0
    #allocation2 [shape = 'u8[8192]{0}', space=vmem, size = 0x2000, scoped, tag = 'input window, operand 0, single buffered']
    #allocation3 [shape = 's32[1]{0}', space=sflag, size = 0x4, scoped, tag = 'scoped memory for tpu_custom_call.1']
    #allocation4 [shape = 's32[1]{0}', space=sflag, size = 0x4, scoped, tag = 'scoped memory for tpu_custom_call.1']
    #allocation5 [shape = 'u8[8192]{0}', space=vmem, size = 0x2000, scoped, tag = 'input window, operand 1, single buffered']
    #allocation6 [shape = 's32[1]{0}', space=sflag, size = 0x4, scoped, tag = 'scoped memory for tpu_custom_call.1']
    #allocation7 [shape = 'u8[8192]{0}', space=vmem, size = 0x2000, scoped, tag = 'input window, operand 2, single buffered']
    #allocation8 [shape = 'u8[8192]{0}', space=vmem, size = 0x2000, scoped, tag = 'input window, operand 3, single buffered']
    #allocation9 [shape = 's32[1]{0}', space=sflag, size = 0x4, scoped, tag = 'scoped memory for tpu_custom_call.1']
    #allocation10 [shape = 'u8[8192]{0}', space=vmem, size = 0x2000, scoped, tag = 'output window, operand 0, single buffered']
    #allocation11 [shape = 'u8[8192]{0}', space=vmem, size = 0x2000, scoped, tag = 'output window, operand 1, single buffered']
    #allocation12 [shape = 's32[1]{0}', space=sflag, size = 0x4, scoped, tag = 'scoped memory for tpu_custom_call.1']
    %16 = vsyncpa [#allocation3], 0
    %17 = vsyncpa [#allocation6], 0
    %18 = vsyncpa [#allocation9], 0
    %19 = vsyncpa [#allocation4], 0
    %20 = vsyncpa [#allocation12], 0
    // Predicated region
    $region2: #{tpu_custom_call.1} parent=1 // pred_check
      _
    $region3: #{tpu_custom_call.1} parent=1 // pred_check_branch
      %22 = sbr.rel (0) target = $region5
    $region4: #{tpu_custom_call.1} parent=1 // pred_region
      %24 = vsyncadd [#allocation3], 0
      %s25 = sshll.u32 %s0, 4
      %s26 = int_to_ptr.hbm [resolvable:$true] %s25
      %s27 = sshll.u32 [#allocation2], 4
      %s28 = int_to_ptr.vmem [resolvable:$true] %s27
      %33 = dma.hbm_to_vmem [thread:$0]  %s26, 256, %s28, [#allocation3], 128, 128, 8
    $region5: #{tpu_custom_call.1} parent=1 // pred_fallthru
      _
    // Predicated region
    $region6: #{tpu_custom_call.1} parent=1 // pred_check
      _
    $region7: #{tpu_custom_call.1} parent=1 // pred_check_branch
      %35 = sbr.rel (0) target = $region9
    $region8: #{tpu_custom_call.1} parent=1 // pred_region
      %37 = vsyncadd [#allocation6], 0
      %s38 = sshll.u32 %s1, 4
      %s39 = int_to_ptr.hbm [resolvable:$true] %s38
      %s40 = sshll.u32 [#allocation5], 4
      %s41 = int_to_ptr.vmem [resolvable:$true] %s40
      %46 = dma.hbm_to_vmem [thread:$0]  %s39, 256, %s41, [#allocation6], 128, 128, 8
    $region9: #{tpu_custom_call.1} parent=1 // pred_fallthru
      _
    // Predicated region
    $region10: #{tpu_custom_call.1} parent=1 // pred_check
      _
    $region11: #{tpu_custom_call.1} parent=1 // pred_check_branch
      %48 = sbr.rel (0) target = $region13
    $region12: #{tpu_custom_call.1} parent=1 // pred_region
      %50 = vsyncadd [#allocation6], 0
      %s51 = sshll.u32 %s2, 4
      %s52 = int_to_ptr.hbm [resolvable:$true] %s51
      %s53 = sshll.u32 [#allocation7], 4
      %s54 = int_to_ptr.vmem [resolvable:$true] %s53
      %59 = dma.hbm_to_vmem [thread:$0]  %s52, 256, %s54, [#allocation6], 128, 128, 8
    $region13: #{tpu_custom_call.1} parent=1 // pred_fallthru
      _
    // Predicated region
    $region14: #{tpu_custom_call.1} parent=1 // pred_check
      _
    $region15: #{tpu_custom_call.1} parent=1 // pred_check_branch
      %61 = sbr.rel (0) target = $region17
    $region16: #{tpu_custom_call.1} parent=1 // pred_region
      %63 = vsyncadd [#allocation9], 0
      %s64 = sshll.u32 %s3, 4
      %s65 = int_to_ptr.hbm [resolvable:$true] %s64
      %s66 = sshll.u32 [#allocation8], 4
      %s67 = int_to_ptr.vmem [resolvable:$true] %s66
      %72 = dma.hbm_to_vmem [thread:$0]  %s65, 256, %s67, [#allocation9], 128, 128, 8
    $region17: #{tpu_custom_call.1} parent=1 // pred_fallthru
      _
    // Predicated region
    $region18: #{tpu_custom_call.1} parent=1 // pred_check
      _
    $region19: #{tpu_custom_call.1} parent=1 // pred_check_branch
      %74 = sbr.rel (0) target = $region21
    $region20: #{tpu_custom_call.1} parent=1 // pred_region
      _
    $region21: #{tpu_custom_call.1} parent=1 // pred_fallthru
      _
    // Predicated region
    $region22: #{tpu_custom_call.1} parent=1 // pred_check
      _
    $region23: #{tpu_custom_call.1} parent=1 // pred_check_branch
      %76 = sbr.rel (0) target = $region25
    $region24: #{tpu_custom_call.1} parent=1 // pred_region
      _
    $region25: #{tpu_custom_call.1} parent=1 // pred_fallthru
      _
    // Predicated region
    $region26: #{tpu_custom_call.1} parent=1 // pred_check
      _
    $region27: #{tpu_custom_call.1} parent=1 // pred_check_branch
      %78 = sbr.rel (0) target = $region29
    $region28: #{tpu_custom_call.1} parent=1 // pred_region
      _
    $region29: #{tpu_custom_call.1} parent=1 // pred_fallthru
      _
    // Predicated region
    $region30: #{tpu_custom_call.1} parent=1 // pred_check
      _
    $region31: #{tpu_custom_call.1} parent=1 // pred_check_branch
      %80 = sbr.rel (0) target = $region33
    $region32: #{tpu_custom_call.1} parent=1 // pred_region
      _
    $region33: #{tpu_custom_call.1} parent=1 // pred_fallthru
      _
    // Predicated region
    $region34: #{tpu_custom_call.1} parent=1 // pred_check
      _
    $region35: #{tpu_custom_call.1} parent=1 // pred_check_branch
      %82 = sbr.rel (0) target = $region37
    $region36: #{tpu_custom_call.1} parent=1 // pred_region
      _
    $region37: #{tpu_custom_call.1} parent=1 // pred_fallthru
      _
    // Predicated region
    $region38: #{tpu_custom_call.1} parent=1 // pred_check
      _
    $region39: #{tpu_custom_call.1} parent=1 // pred_check_branch
      %84 = sbr.rel (0) target = $region41
    $region40: #{tpu_custom_call.1} parent=1 // pred_region
      %86 = dma.done [#allocation3], 256
    $region41: #{tpu_custom_call.1} parent=1 // pred_fallthru
      _
    // Predicated region
    $region42: #{tpu_custom_call.1} parent=1 // pred_check
      _
    $region43: #{tpu_custom_call.1} parent=1 // pred_check_branch
      %88 = sbr.rel (0) target = $region45
    $region44: #{tpu_custom_call.1} parent=1 // pred_region
      %90 = dma.done [#allocation6], 256
    $region45: #{tpu_custom_call.1} parent=1 // pred_fallthru
      _
    // Predicated region
    $region46: #{tpu_custom_call.1} parent=1 // pred_check
      _
    $region47: #{tpu_custom_call.1} parent=1 // pred_check_branch
      %92 = sbr.rel (0) target = $region49
    $region48: #{tpu_custom_call.1} parent=1 // pred_region
      %94 = dma.done [#allocation6], 256
    $region49: #{tpu_custom_call.1} parent=1 // pred_fallthru
      _
    // Predicated region
    $region50: #{tpu_custom_call.1} parent=1 // pred_check
      _
    $region51: #{tpu_custom_call.1} parent=1 // pred_check_branch
      %96 = sbr.rel (0) target = $region53
    $region52: #{tpu_custom_call.1} parent=1 // pred_region
      %98 = dma.done [#allocation9], 256
    $region53: #{tpu_custom_call.1} parent=1 // pred_fallthru
      _
    %v99 = vld [vmem:[#allocation2] sm:$0xff]
    %v100 = vld [vmem:[#allocation2 + $0x8] sm:$0xff]
    %v101 = vld [vmem:[#allocation7] sm:$0xff]
    %v102 = vld [vmem:[#allocation7 + $0x8] sm:$0xff]
    %v103 = vadd.f32 %v99, %v101
    %v104 = vadd.f32 %v100, %v102
    %v105 = vld [vmem:[#allocation5] sm:$0xff]
    %v106 = vld [vmem:[#allocation5 + $0x8] sm:$0xff]
    %v107 = vld [vmem:[#allocation8] sm:$0xff]
    %v108 = vld [vmem:[#allocation8 + $0x8] sm:$0xff]
    %v109 = vadd.f32 %v105, %v107
    %v110 = vadd.f32 %v106, %v108
    %vm111 = vcmask 261120
    %v112 = vsel %vm111, %v103, 0.0
    %113 = vadd.xlane.f32.xlu0 %v112
    %v114 = vpop.xlane.xlu0 %113
    %v115 = vsel %vm111, %v104, 0.0
    %116 = vadd.xlane.f32.xlu0 %v115
    %v117 = vpop.xlane.xlu0 %116
    %v118 = vrcp.pop 32.0
    %v119 = vmul.f32 32.0, %v118
    %v120 = vsub.f32 1.0, %v119
    %v121 = vmul.f32 %v118, %v120
    %v122 = vadd.f32 %v118, %v121
    %vm123 = vweird.f32 %v118
    %v124 = vsel %vm123, %v118, %v122
    %v125 = vmul.f32 %v114, %v124
    %v126 = vmul.f32 %v117, %v124
    %v127 = vsel %vm111, %v109, 0.0
    %128 = vadd.xlane.f32.xlu0 %v127
    %v129 = vpop.xlane.xlu0 %128
    %v130 = vsel %vm111, %v110, 0.0
    %131 = vadd.xlane.f32.xlu0 %v130
    %v132 = vpop.xlane.xlu0 %131
    %v133 = vmul.f32 %v129, %v124
    %v134 = vmul.f32 %v132, %v124
    %v135 = vsub.f32 %v103, %v125
    %v136 = vsub.f32 %v104, %v126
    %v137 = vsub.f32 %v109, %v133
    %v138 = vsub.f32 %v110, %v134
    %v139 = vmul.f32 %v135, %v135
    %v140 = vmul.f32 %v136, %v136
    %v141 = vsel %vm111, %v139, 0.0
    %142 = vadd.xlane.f32.xlu0 %v141
    %v143 = vpop.xlane.xlu0 %142
    %v144 = vsel %vm111, %v140, 0.0
    %145 = vadd.xlane.f32.xlu0 %v144
    %v146 = vpop.xlane.xlu0 %145
    %v147 = vmul.f32 %v143, 0.032258064
    %v148 = vmul.f32 %v146, 0.032258064
    %v149 = vmul.f32 %v137, %v137
    %v150 = vmul.f32 %v138, %v138
    %v151 = vsel %vm111, %v149, 0.0
    %152 = vadd.xlane.f32.xlu0 %v151
    %v153 = vpop.xlane.xlu0 %152
    %v154 = vsel %vm111, %v150, 0.0
    %155 = vadd.xlane.f32.xlu0 %v154
    %v156 = vpop.xlane.xlu0 %155
    %v157 = vmul.f32 %v153, 0.032258064
    %v158 = vmul.f32 %v156, 0.032258064
    %v159 = vadd.f32 %v147, %v157
    %v160 = vadd.f32 %v148, %v158
    %v161 = vadd.f32 %v159, 1e-09
    %v162 = vadd.f32 %v160, 1e-09
    %v163 = vrsqrt.pop %v161
    %v164 = vmul.f32 %v163, %v161
    %v165 = vmul.f32 %v164, %v163
    %v166 = vmul.f32 0.5, %v165
    %v167 = vsub.f32 1.5, %v166
    %v168 = vmul.f32 %v163, %v167
    %vm169 = vweird.f32 %v161
    %vm170 = vweird.f32 %v163
    %vm171 = vmor %vm169, %vm170
    %v172 = vsel %vm171, %v163, %v168
    %v173 = vrsqrt.pop %v162
    %v174 = vmul.f32 %v173, %v162
    %v175 = vmul.f32 %v174, %v173
    %v176 = vmul.f32 0.5, %v175
    %v177 = vsub.f32 1.5, %v176
    %v178 = vmul.f32 %v173, %v177
    %vm179 = vweird.f32 %v162
    %vm180 = vweird.f32 %v173
    %vm181 = vmor %vm179, %vm180
    %v182 = vsel %vm181, %v173, %v178
    %v183 = vmul.f32 %v135, %v172
    %v184 = vmul.f32 %v136, %v182
    %v185 = vmul.f32 %v137, %v172
    %v186 = vmul.f32 %v138, %v182
    %v187 = vld [vmem:[%s4] sm:$0x1]
    %v188 = vld [vmem:[%s5] sm:$0x1]
    %v189 = vld [vmem:[%s6] sm:$0x1]
    %v191 = vperm.slane %v187, 0
    %v193 = vmul.f32 %v183, %v191
    %v194 = vmul.f32 %v184, %v191
    %v196 = vperm.slane %v189, 0
    %v198 = vmul.f32 %v185, %v196
    %v199 = vmul.f32 %v186, %v196
    %v200 = vadd.f32 %v193, %v198
    %v201 = vadd.f32 %v194, %v199
    %v202 = vld [vmem:[%s7] sm:$0x1]
    %v204 = vperm.slane %v202, 0
    %v206 = vadd.f32 %v200, %v204
    %v207 = vadd.f32 %v201, %v204
    %208 = vst.msk [vmem:[#allocation10] sm:$0xff] %vm111, %v206
    %209 = vst.msk [vmem:[#allocation10 + $0x8] sm:$0xff] %vm111, %v207
    %v210 = vmul.f32 %v183, %v196
    %v211 = vmul.f32 %v184, %v196
    %v213 = vperm.slane %v188, 0
    %v215 = vmul.f32 %v185, %v213
    %v216 = vmul.f32 %v186, %v213
    %v217 = vadd.f32 %v210, %v215
    %v218 = vadd.f32 %v211, %v216
    %v219 = vld [vmem:[%s8] sm:$0x1]
    %v221 = vperm.slane %v219, 0
    %v223 = vadd.f32 %v217, %v221
    %v224 = vadd.f32 %v218, %v221
    %225 = vst.msk [vmem:[#allocation11] sm:$0xff] %vm111, %v223
    %226 = vst.msk [vmem:[#allocation11 + $0x8] sm:$0xff] %vm111, %v224
    // Predicated region
    $region54: #{tpu_custom_call.1} parent=1 // pred_check
      _
    $region55: #{tpu_custom_call.1} parent=1 // pred_check_branch
      %228 = sbr.rel (0) target = $region57
    $region56: #{tpu_custom_call.1} parent=1 // pred_region
      %230 = vsyncadd [#allocation4], 0
      %s231 = sshll.u32 [#allocation10], 4
      %s232 = int_to_ptr.vmem [resolvable:$true] %s231
      %s233 = sshll.u32 %s9, 4
      %s234 = int_to_ptr.hbm [resolvable:$true] %s233
      %239 = dma.vmem_to_hbm [thread:$0]  %s232, 256, %s234, [#allocation4], 128, 128, 8
    $region57: #{tpu_custom_call.1} parent=1 // pred_fallthru
      _
    // Predicated region
    $region58: #{tpu_custom_call.1} parent=1 // pred_check
      _
    $region59: #{tpu_custom_call.1} parent=1 // pred_check_branch
      %241 = sbr.rel (0) target = $region61
    $region60: #{tpu_custom_call.1} parent=1 // pred_region
      %243 = vsyncadd [#allocation12], 0
      %s244 = sshll.u32 [#allocation11], 4
      %s245 = int_to_ptr.vmem [resolvable:$true] %s244
      %s246 = sshll.u32 %s10, 4
      %s247 = int_to_ptr.hbm [resolvable:$true] %s246
      %252 = dma.vmem_to_hbm [thread:$0]  %s245, 256, %s247, [#allocation12], 128, 128, 8
    $region61: #{tpu_custom_call.1} parent=1 // pred_fallthru
      _
    // Predicated region
    $region62: #{tpu_custom_call.1} parent=1 // pred_check
      _
    $region63: #{tpu_custom_call.1} parent=1 // pred_check_branch
      %254 = sbr.rel (0) target = $region65
    $region64: #{tpu_custom_call.1} parent=1 // pred_region
      %256 = dma.done [#allocation4], 256
    $region65: #{tpu_custom_call.1} parent=1 // pred_fallthru
      _
    // Predicated region
    $region66: #{tpu_custom_call.1} parent=1 // pred_check
      _
    $region67: #{tpu_custom_call.1} parent=1 // pred_check_branch
      %258 = sbr.rel (0) target = $region69
    $region68: #{tpu_custom_call.1} parent=1 // pred_region
      %260 = dma.done [#allocation12], 256
    $region69: #{tpu_custom_call.1} parent=1 // pred_fallthru
      _
    %261 = vsyncpa [#allocation3], 1
    %262 = vsyncpa [#allocation6], 1
    %263 = vsyncpa [#allocation9], 1
    %264 = vsyncpa [#allocation4], 1
    %265 = vsyncpa [#allocation12], 1

</llo_original>
